<compile_context>
chip_gen: v7x
topology: tpu7x:2x2x1
jax: 0.10.0
libtpu: 0.0.40
codegen_flags: <defaults>
</compile_context>

<pallas_src>
import jax
import jax.numpy as jnp
from jax.experimental import pallas as pl
from jax.experimental.pallas import tpu as pltpu


def _make_residual_kernel(use_mxu: bool, c: int):
    """Kernel refs: x (1, C, T), w (see wrapper), b (C, 1), o (1, C, T)."""

    if use_mxu:

        def kernel(x_ref, w_ref, b_ref, o_ref):
            x = x_ref[0]                                  # (C_in, T), model dtype
            w = w_ref[...]                                # (C_out, C_in), model dtype
            # Single MXU pass (bf16 operands stay bf16), f32 accumulation.
            y = jnp.dot(w, x, preferred_element_type=jnp.float32)
            b = b_ref[...].astype(jnp.float32)            # (C_out, 1)
            # conv + bias + residual fused into one lane-dense store.
            o_ref[0] = (y + b + x.astype(jnp.float32)).astype(o_ref.dtype)

    else:

        def kernel(x_ref, w_ref, b_ref, o_ref):
            x = x_ref[0]                                  # (C, T)
            xf = x.astype(jnp.float32)                    # f32 VPU math (v5e-safe)
            b = b_ref[...].astype(jnp.float32)            # (C, 1)
            # Accumulator starts as bias + residual: one fewer full-tile add.
            y = xf + b
            wcols = w_ref[...].astype(jnp.float32)        # (C*C, 1), cin-major columns
            for cin in range(c):                          # static unroll, C <= 8
                col = wcols[cin * c:(cin + 1) * c, :]     # (C, 1) static sublane slice
                y = y + col * xf[cin:cin + 1, :]
            o_ref[0] = y.astype(o_ref.dtype)

    return kernel


def _pick_spatial_tile(hw, c, x_itemsize, w_resident_bytes, stream_budget_bytes,
                       n_batch=1, max_lanes=32768):
    """Largest lane tile (multiple of 128) fitting the streaming VMEM budget.

    Budget counts the double-buffered x / out streams in model dtype plus the
    in-kernel f32 intermediates (accumulator + f32 residual copy); the
    (possibly single-buffered) weight residency is subtracted up front.
    """
    if hw <= 128:
        return hw                      # block == full last dim is always legal
    budget = max(stream_budget_bytes - w_resident_bytes, 2 << 20)
    per_lane = c * (4 * x_itemsize     # 2 buffers each for x and out streams
                    + 2 * 4)           # f32 accumulator + f32 residual copy
    t = max(128, (budget // per_lane) // 128 * 128)
    t = min(t, max_lanes)
    hw_floor = hw if hw % 128 == 0 else max(128, (hw // 128) * 128)
    t = min(t, hw_floor)
    # Megacore load balance (v7x has 2 TCs): keep >= 2 total grid steps when
    # the batch is tiny and the spatial extent allows a split.
    if n_batch * (-(-hw // t)) < 2 and t > 128:
        half = -(-hw // 2)
        t = min(hw_floor, max(128, ((half + 127) // 128) * 128))
    return t


def residual_conv1x1(x_nchw, weight, bias):
    """out = Conv2d_1x1(x) + x   (Residual module with fn = 1x1 conv).

    x_nchw : (N, C, H, W)
    weight : (C_out, C_in, 1, 1) with C_out == C_in
    bias   : (C_out,)
    """
    N, C, H, W = x_nchw.shape
    assert weight.shape == (C, C, 1, 1)
    HW = H * W

    # Free reshape (contiguous last-dims merge) -- no transpose, no pad.
    x3d = x_nchw.reshape(N, C, HW)

    # MXU for anything beyond tiny channel counts; VPU only for C <= 8.
    use_mxu = C > 8

    if use_mxu:
        # Model-dtype weight (bf16 stays bf16 -> one MXU pass, half the VMEM).
        w_arr = weight[:, :, 0, 0].astype(x_nchw.dtype)       # (C_out, C_in)
        w_block = (C, C)
    else:
        # Column-stacked (cin-major) f32 weight: each per-cin column is a
        # cheap static sublane slice inside the kernel (no lane extract).
        w_arr = weight[:, :, 0, 0].T.reshape(C * C, 1).astype(jnp.float32)
        w_block = (C * C, 1)

    b_col = bias.reshape(C, 1).astype(jnp.float32)

    # Generation-aware VMEM budgeting (v7x: 64 MiB physical / 32 MiB scoped;
    # v5e / v6e: 128 MiB physical).
    try:
        vmem_cap = pltpu.get_tpu_info().vmem_capacity_bytes
    except Exception:  # pragma: no cover - conservative fallback
        vmem_cap = 128 << 20
    if vmem_cap <= (64 << 20):
        stream_budget = 12 << 20
        vmem_limit = 32 << 20
    else:
        stream_budget = 24 << 20
        vmem_limit = 64 << 20

    # The weight's index_map is constant; single-buffer it once it is big
    # enough for the extra buffer to matter.
    single_buffer_w = use_mxu and C >= 256
    w_nbuf = 1 if single_buffer_w else 2
    w_resident = w_nbuf * w_arr.size * w_arr.dtype.itemsize
    # TODO(synk): for C >= ~2048 add a third 'arbitrary' grid axis tiling C_in
    # with an f32 VMEM accumulator instead of holding the full (C, C) weight.

    t_hw = _pick_spatial_tile(HW, C, x_nchw.dtype.itemsize, w_resident,
                              stream_budget, n_batch=N)
    grid = (N, pl.cdiv(HW, t_hw))

    w_spec_kwargs = {}
    if single_buffer_w:
        w_spec_kwargs["pipeline_mode"] = pl.Buffered(1)
    # TODO(synk): on v7x consider pl.Buffered(3) on the x/out streams to hide
    # per-step DMA setup at 3.2 TB/s when tiles are forced small.

    out3d = pl.pallas_call(
        _make_residual_kernel(use_mxu, C),
        out_shape=jax.ShapeDtypeStruct((N, C, HW), x_nchw.dtype),
        grid_spec=pltpu.PrefetchScalarGridSpec(
            num_scalar_prefetch=0,
            grid=grid,
            in_specs=[
                pl.BlockSpec((1, C, t_hw), lambda n, i: (n, 0, i)),   # x tile
                pl.BlockSpec(w_block, lambda n, i: (0, 0),            # weight
                             **w_spec_kwargs),
                pl.BlockSpec((C, 1), lambda n, i: (0, 0)),            # bias col
            ],
            out_specs=pl.BlockSpec((1, C, t_hw), lambda n, i: (n, 0, i)),
        ),
        compiler_params=pltpu.CompilerParams(
            dimension_semantics=("parallel", "parallel"),
            vmem_limit_bytes=vmem_limit,
        ),
    )(x3d, w_arr, b_col)

    return out3d.reshape(N, C, H, W)    # free reshape back


if __name__ == "__main__":
    key = jax.random.PRNGKey(0)
    kx, kw, kb = jax.random.split(key, 3)

    N, C, H, W = 2, 4, 16, 16
    x = jax.random.normal(kx, (N, C, H, W), dtype=jnp.float32)
    # Deterministic synthetic parameters for fn = Conv2d(C, C, kernel_size=1)
    weight = jax.random.normal(kw, (C, C, 1, 1), dtype=jnp.float32) * 0.1
    bias = jax.random.normal(kb, (C,), dtype=jnp.float32) * 0.1

    out = residual_conv1x1(x, weight, bias)
    out = jax.block_until_ready(out)

    # Pure-JAX reference: fn(x) + x with fn a 1x1 conv (NCHW semantics).
    ref = (jnp.einsum("nchw,oc->nohw", x, weight[:, :, 0, 0])
           + bias[None, :, None, None] + x)
    assert out.shape == (N, C, H, W)
    assert jnp.allclose(out, ref, atol=1e-5, rtol=1e-5)

    print("KERNEL_OK")
</pallas_src>

<mosaic_0001>
module attributes {stable_mosaic.version = 11 : i64} {
  func.func @kernel(%arg0: i32, %arg1: i32, %arg2: memref<1x4x256xf32, #tpu.memory_space<vmem>>, %arg3: memref<16x1xf32, #tpu.memory_space<vmem>>, %arg4: memref<4x1xf32, #tpu.memory_space<vmem>>, %arg5: memref<1x4x256xf32, #tpu.memory_space<vmem>>) attributes {dimension_semantics = [#tpu.dimension_semantics<parallel>, #tpu.dimension_semantics<parallel>], iteration_bounds = array<i64: 2, 1>, scalar_prefetch = 0 : i64, scratch_operands = 0 : i64, tpu.core_type = #tpu.core_type<tc>, window_params = [{transform_indices = @transform_0, window_bounds = array<i64: 1, 4, 256>}, {pipeline_mode = #tpu.pipeline_mode<synchronous>, transform_indices = @transform_1, window_bounds = array<i64: 16, 1>}, {pipeline_mode = #tpu.pipeline_mode<synchronous>, transform_indices = @transform_2, window_bounds = array<i64: 4, 1>}, {transform_indices = @transform_3, window_bounds = array<i64: 1, 4, 256>}]} {
    %c0 = arith.constant 0 : index
    %c0_0 = arith.constant 0 : index
    %c0_1 = arith.constant 0 : index
    %0 = vector.load %arg2[%c0, %c0_0, %c0_1] : memref<1x4x256xf32, #tpu.memory_space<vmem>>, vector<1x4x256xf32>
    %1 = vector.shape_cast %0 : vector<1x4x256xf32> to vector<4x256xf32>
    %c0_2 = arith.constant 0 : index
    %c0_3 = arith.constant 0 : index
    %2 = vector.load %arg4[%c0_2, %c0_3] : memref<4x1xf32, #tpu.memory_space<vmem>>, vector<4x1xf32>
    %3 = vector.broadcast %2 : vector<4x1xf32> to vector<4x256xf32>
    %4 = arith.addf %1, %3 : vector<4x256xf32>
    %c0_4 = arith.constant 0 : index
    %c0_5 = arith.constant 0 : index
    %5 = vector.load %arg3[%c0_4, %c0_5] : memref<16x1xf32, #tpu.memory_space<vmem>>, vector<16x1xf32>
    %6 = vector.extract_strided_slice %5 {offsets = [0, 0], sizes = [4, 1], strides = [1, 1]} : vector<16x1xf32> to vector<4x1xf32>
    %7 = vector.extract_strided_slice %1 {offsets = [0, 0], sizes = [1, 256], strides = [1, 1]} : vector<4x256xf32> to vector<1x256xf32>
    %8 = vector.broadcast %6 : vector<4x1xf32> to vector<4x256xf32>
    %9 = vector.broadcast %7 : vector<1x256xf32> to vector<4x256xf32>
    %10 = arith.mulf %8, %9 : vector<4x256xf32>
    %11 = arith.addf %4, %10 : vector<4x256xf32>
    %12 = vector.extract_strided_slice %5 {offsets = [4, 0], sizes = [4, 1], strides = [1, 1]} : vector<16x1xf32> to vector<4x1xf32>
    %13 = vector.extract_strided_slice %1 {offsets = [1, 0], sizes = [1, 256], strides = [1, 1]} : vector<4x256xf32> to vector<1x256xf32>
    %14 = vector.broadcast %12 : vector<4x1xf32> to vector<4x256xf32>
    %15 = vector.broadcast %13 : vector<1x256xf32> to vector<4x256xf32>
    %16 = arith.mulf %14, %15 : vector<4x256xf32>
    %17 = arith.addf %11, %16 : vector<4x256xf32>
    %18 = vector.extract_strided_slice %5 {offsets = [8, 0], sizes = [4, 1], strides = [1, 1]} : vector<16x1xf32> to vector<4x1xf32>
    %19 = vector.extract_strided_slice %1 {offsets = [2, 0], sizes = [1, 256], strides = [1, 1]} : vector<4x256xf32> to vector<1x256xf32>
    %20 = vector.broadcast %18 : vector<4x1xf32> to vector<4x256xf32>
    %21 = vector.broadcast %19 : vector<1x256xf32> to vector<4x256xf32>
    %22 = arith.mulf %20, %21 : vector<4x256xf32>
    %23 = arith.addf %17, %22 : vector<4x256xf32>
    %24 = vector.extract_strided_slice %5 {offsets = [12, 0], sizes = [4, 1], strides = [1, 1]} : vector<16x1xf32> to vector<4x1xf32>
    %25 = vector.extract_strided_slice %1 {offsets = [3, 0], sizes = [1, 256], strides = [1, 1]} : vector<4x256xf32> to vector<1x256xf32>
    %26 = vector.broadcast %24 : vector<4x1xf32> to vector<4x256xf32>
    %27 = vector.broadcast %25 : vector<1x256xf32> to vector<4x256xf32>
    %28 = arith.mulf %26, %27 : vector<4x256xf32>
    %29 = arith.addf %23, %28 : vector<4x256xf32>
    %c0_6 = arith.constant 0 : index
    %c0_7 = arith.constant 0 : index
    %c0_8 = arith.constant 0 : index
    %30 = vector.load %arg5[%c0_6, %c0_7, %c0_8] : memref<1x4x256xf32, #tpu.memory_space<vmem>>, vector<1x4x256xf32>
    %31 = vector.shape_cast %30 : vector<1x4x256xf32> to vector<4x256xf32>
    %32 = vector.shape_cast %29 : vector<4x256xf32> to vector<1x4x256xf32>
    tpu.vector_store %arg5[%c0_6, %c0_7, %c0_8], %32 {strides = array<i32>} : memref<1x4x256xf32, #tpu.memory_space<vmem>>, vector<1x4x256xf32>,
    return
  }
  func.func @transform_0(%arg0: i32, %arg1: i32) -> (i32, i32, i32) {
    %c0_i32 = arith.constant 0 : i32
    %c0_i32_0 = arith.constant 0 : i32
    return %arg0, %c0_i32, %arg1 : i32, i32, i32
  }
  func.func @transform_1(%arg0: i32, %arg1: i32) -> (i32, i32) {
    %c0_i32 = arith.constant 0 : i32
    %c0_i32_0 = arith.constant 0 : i32
    %c0_i32_1 = arith.constant 0 : i32
    return %c0_i32, %c0_i32_0 : i32, i32
  }
  func.func @transform_2(%arg0: i32, %arg1: i32) -> (i32, i32) {
    %c0_i32 = arith.constant 0 : i32
    %c0_i32_0 = arith.constant 0 : i32
    %c0_i32_1 = arith.constant 0 : i32
    return %c0_i32, %c0_i32_0 : i32, i32
  }
  func.func @transform_3(%arg0: i32, %arg1: i32) -> (i32, i32, i32) {
    %c0_i32 = arith.constant 0 : i32
    %c0_i32_0 = arith.constant 0 : i32
    return %arg0, %c0_i32, %arg1 : i32, i32, i32
  }
}

</mosaic_0001>

<llo_original>
// kernel: tpu_custom_call.1
$region0: #{tpu_custom_call.1}
  #allocation0 [shape = 'u32[]', space=smem, size = 0x4, offset = 0x4, fixed_abs, tag = 'smem constant byte address 0x4 - core index']
  #allocation1 [shape = 'u32[144,128]{1,0:T(1,128)}', space=vmem, size = 0x12000, scoped, tag = 'internal scratch']
  %s0 = inlined_call_operand.hbm [shape: f32[2,4,256], index: 0, kind: input, shape index: {}]
  %s1 = inlined_call_operand.hbm [shape: f32[16,1], index: 1, kind: input, shape index: {}]
  %s2 = inlined_call_operand.hbm [shape: f32[4,1], index: 2, kind: input, shape index: {}]
  %s3 = inlined_call_operand.hbm [shape: f32[2,4,256], index: 3, kind: output, shape index: {}]
  %s4 = sld [smem:[#allocation0]]
  $region57: #{tpu_custom_call.1} parent=0
    _
  %s6 = ssub.s32 1, %s4
  %s7 = scalar_select 0, %s6, %s4
  $region1: #{tpu_custom_call.1} parent=0
    #allocation2 [shape = 'u8[8192]{0}', space=vmem, size = 0x2000, scoped, tag = 'input window, operand 0']
    #allocation3 [shape = 's32[2]{0}', space=sflag, size = 0x8, scoped, tag = 'scoped memory for tpu_custom_call.1']
    #allocation4 [shape = 's32[2]{0}', space=sflag, size = 0x8, scoped, tag = 'scoped memory for tpu_custom_call.1']
    #allocation5 [shape = 'u8[8192]{0}', space=vmem, size = 0x2000, scoped, tag = 'input window, operand 1, single buffered']
    #allocation6 [shape = 's32[1]{0}', space=sflag, size = 0x4, scoped, tag = 'scoped memory for tpu_custom_call.1']
    #allocation7 [shape = 'u8[2048]{0}', space=vmem, size = 0x800, scoped, tag = 'input window, operand 2, single buffered']
    #allocation8 [shape = 'u8[8192]{0}', space=vmem, size = 0x2000, scoped, tag = 'output window, operand 0']
    %8 = vsyncpa [#allocation3], 0
    %s9 = scalar_lea.sflag [#allocation3], 1
    %10 = vsyncpa %s9, 0
    %11 = vsyncpa [#allocation6], 0
    %12 = vsyncpa [#allocation4], 0
    %s13 = scalar_lea.sflag [#allocation4], 1
    %14 = vsyncpa %s13, 0
    loop: start=0, step=1, limit=4
    $region2: #{tpu_custom_call.1} parent=1 // loop_pre_header
      _
    $region3: #{tpu_custom_call.1} parent=1 // loop_header
      %s16 = sphi 0, %s20
      %p17 = scmp.ge.s32.totalorder %s16, 4
      %s23 = sphi 0, %s35
      %s24 = sphi 0, %s31
      %s25 = sphi 0, %s23
      %s26 = sphi 0, %s24
      %s27 = sphi 0, %s25
      %s28 = sphi 0, %s26
      %s40 = sphi 0, %s42
      %s43 = sphi 0, %s40
      %s44 = sphi 0, %s43
      %s60 = sphi 0, %s44
      %s64 = sphi 0, %s64
      %s66 = sphi 0, %s64
      %s67 = sphi 0, %s66
      %s81 = sphi 0, %s67
      %s85 = sphi 0, %s85
      %s87 = sphi 0, %s85
      %s88 = sphi 0, %s87
      %s102 = sphi 0, %s88
      %s110 = sphi 0, %s112
      %s113 = sphi 0, %s110
      %s114 = sphi 0, %s113
      %s130 = sphi 0, %s114
    $region4: #{tpu_custom_call.1} parent=1 // loop_header_branch
      %19 = sbr.rel (%p17) target = $region8
    $region5: #{tpu_custom_call.1} parent=1 // loop_body
      %s21 = ssub.s32 %s16, 1
      %s22 = ssub.s32 %s16, 2
      %s29 = sadd.s32 1, %s24
      %p30 = scmp.ge.s32.totalorder %s29, 1
      %s31 = scalar_select %p30, 0, %s29
      %s32 = sadd.s32 1, %s23
      %s33 = scalar_select %p30, %s32, %s23
      %p34 = scmp.ge.s32.totalorder %s33, 2
      %s35 = scalar_select %p34, 0, %s33
      %s36 = ssub.s32 %s23, %s35
      %s37 = ssub.s32 %s24, %s31
      %s38 = sor.u32 %s36, %s37
      %p39 = scmp.eq.s32.totalorder %s38, 0
      %s41 = sadd.s32 %s40, 1
      %s42 = scalar_select %p39, %s40, %s41
      %p45 = pneg %p39
      %p46 = scmp.eq.s32.totalorder %s16, 1
      %p47 = por %p45, %p46
      %p48 = scmp.ne.s32.totalorder %s40, %s43
      %p49 = scmp.eq.s32.totalorder %s16, 0
      %p50 = por %p48, %p49
      %p51 = scmp.ne.s32.totalorder %s40, %s43
      %p52 = scmp.eq.s32.totalorder %s21, 1
      %p53 = por %p51, %p52
      %p54 = scmp.ne.s32.totalorder %s43, %s44
      %p55 = scmp.eq.s32.totalorder %s21, 0
      %p56 = por %p54, %p55
      %p57 = scmp.ne.s32.totalorder %s43, %s44
      %p58 = scmp.eq.s32.totalorder %s22, 1
      %p59 = por %p57, %p58
      %p61 = scmp.ne.s32.totalorder %s44, %s60
      %p62 = scmp.eq.s32.totalorder %s22, 0
      %p63 = por %p61, %p62
      %s65 = sadd.s32 %s64, 1
      %p68 = scmp.eq.s32.totalorder %s16, 1
      %p69 = scmp.ne.s32.totalorder %s64, %s66
      %p70 = scmp.eq.s32.totalorder %s16, 0
      %p71 = por %p69, %p70
      %p72 = scmp.ne.s32.totalorder %s64, %s66
      %p73 = scmp.eq.s32.totalorder %s21, 1
      %p74 = por %p72, %p73
      %p75 = scmp.ne.s32.totalorder %s66, %s67
      %p76 = scmp.eq.s32.totalorder %s21, 0
      %p77 = por %p75, %p76
      %p78 = scmp.ne.s32.totalorder %s66, %s67
      %p79 = scmp.eq.s32.totalorder %s22, 1
      %p80 = por %p78, %p79
      %p82 = scmp.ne.s32.totalorder %s67, %s81
      %p83 = scmp.eq.s32.totalorder %s22, 0
      %p84 = por %p82, %p83
      %s86 = sadd.s32 %s85, 1
      %p89 = scmp.eq.s32.totalorder %s16, 1
      %p90 = scmp.ne.s32.totalorder %s85, %s87
      %p91 = scmp.eq.s32.totalorder %s16, 0
      %p92 = por %p90, %p91
      %p93 = scmp.ne.s32.totalorder %s85, %s87
      %p94 = scmp.eq.s32.totalorder %s21, 1
      %p95 = por %p93, %p94
      %p96 = scmp.ne.s32.totalorder %s87, %s88
      %p97 = scmp.eq.s32.totalorder %s21, 0
      %p98 = por %p96, %p97
      %p99 = scmp.ne.s32.totalorder %s87, %s88
      %p100 = scmp.eq.s32.totalorder %s22, 1
      %p101 = por %p99, %p100
      %p103 = scmp.ne.s32.totalorder %s88, %s102
      %p104 = scmp.eq.s32.totalorder %s22, 0
      %p105 = por %p103, %p104
      %s106 = ssub.s32 %s23, %s35
      %s107 = ssub.s32 %s24, %s31
      %s108 = sor.u32 %s106, %s107
      %p109 = scmp.eq.s32.totalorder %s108, 0
      %s111 = sadd.s32 %s110, 1
      %s112 = scalar_select %p109, %s110, %s111
      %p115 = pneg %p109
      %p116 = scmp.eq.s32.totalorder %s16, 1
      %p117 = por %p115, %p116
      %p118 = scmp.ne.s32.totalorder %s110, %s113
      %p119 = scmp.eq.s32.totalorder %s16, 0
      %p120 = por %p118, %p119
      %p121 = scmp.ne.s32.totalorder %s110, %s113
      %p122 = scmp.eq.s32.totalorder %s21, 1
      %p123 = por %p121, %p122
      %p124 = scmp.ne.s32.totalorder %s113, %s114
      %p125 = scmp.eq.s32.totalorder %s21, 0
      %p126 = por %p124, %p125
      %p127 = scmp.ne.s32.totalorder %s113, %s114
      %p128 = scmp.eq.s32.totalorder %s22, 1
      %p129 = por %p127, %p128
      %p131 = scmp.ne.s32.totalorder %s114, %s130
      %p132 = scmp.eq.s32.totalorder %s22, 0
      %p133 = por %p131, %p132
      %p134 = scmp.le.s32.totalorder 1, %s16
      %p135 = scmp.lt.s32.totalorder %s16, 3
      %p136 = pnand %p134, %p135
      %p137 = pneg %p136
      // Predicated region
      $region9: #{tpu_custom_call.1} parent=5 // pred_check
        _
      $region10: #{tpu_custom_call.1} parent=5 // pred_check_branch
        %139 = sbr.rel (%p136) target = $region12
      $region11: #{tpu_custom_call.1} parent=5 // pred_region
        %s140 = ssub.s32 %s16, 1
        // Predicated region
        $region13: #{tpu_custom_call.1} parent=11 // pred_check
          %p141 = pneg %p77
        $region14: #{tpu_custom_call.1} parent=11 // pred_check_branch
          %143 = sbr.rel (%p141) target = $region16
        $region15: #{tpu_custom_call.1} parent=11 // pred_region
          %s145 = ssub.s32 256, 256
          %146 = vsyncadd [#allocation6], %s145
          %s147 = sshll.u32 [#allocation5], 4
          %s148 = int_to_ptr.vmem [resolvable:$true] %s147
          %153 = dma.hbm_to_vmem [thread:$0]  %s1, 256, %s148, [#allocation6], 128, 128, 8
        $region16: #{tpu_custom_call.1} parent=11 // pred_fallthru
          _
        // Predicated region
        $region17: #{tpu_custom_call.1} parent=11 // pred_check
          %p154 = pneg %p98
        $region18: #{tpu_custom_call.1} parent=11 // pred_check_branch
          %156 = sbr.rel (%p154) target = $region20
        $region19: #{tpu_custom_call.1} parent=11 // pred_region
          %s158 = ssub.s32 64, 64
          %159 = vsyncadd [#allocation6], %s158
          %s161 = sshll.u32 [#allocation7], 4
          %s162 = int_to_ptr.vmem [resolvable:$true] %s161
          %164 = dma.hbm_to_vmem [thread:$0]  %s2, 64, %s162, [#allocation6]
        $region20: #{tpu_custom_call.1} parent=11 // pred_fallthru
          _
      $region12: #{tpu_custom_call.1} parent=5 // pred_fallthru
        _
      %p165 = scmp.lt.s32.totalorder %s16, 2
      // Predicated region
      $region21: #{tpu_custom_call.1} parent=5 // pred_check
        %p166 = pneg %p165
      $region22: #{tpu_custom_call.1} parent=5 // pred_check_branch
        %168 = sbr.rel (%p166) target = $region24
      $region23: #{tpu_custom_call.1} parent=5 // pred_region
        // Predicated region
        $region25: #{tpu_custom_call.1} parent=23 // pred_check
          %p169 = pneg %p50
        $region26: #{tpu_custom_call.1} parent=23 // pred_check_branch
          %171 = sbr.rel (%p169) target = $region28
        $region27: #{tpu_custom_call.1} parent=23 // pred_region
          %s172 = sand.u32 %s40, 1
          %s173 = scalar_lea.sflag [#allocation3], %s172
          %s174 = sand.u32 %s40, 1
          %s175 = smul.addr %s174, 8
          %s176 = scalar_lea.vmem [#allocation2], %s175
          %s177 = smul.u32 2, %s24
          %s179 = ssub.s32 128, 128
          %180 = vsyncadd %s173, %s179
          %s181 = smul.addr %s23, 2
          %s182 = sadd.s32 %s177, %s181
          %s183 = smul.addr %s182, 64
          %s184 = scalar_lea.hbm %s0, %s183
          %s186 = sshll.u32 %s176, 4
          %s187 = int_to_ptr.vmem [resolvable:$true] %s186
          %189 = dma.hbm_to_vmem [thread:$0]  %s184, 128, %s187, %s173
        $region28: #{tpu_custom_call.1} parent=23 // pred_fallthru
          _
      $region24: #{tpu_custom_call.1} parent=5 // pred_fallthru
        _
      %p190 = scmp.le.s32.totalorder 1, %s16
      %p191 = scmp.lt.s32.totalorder %s16, 3
      %p192 = pnand %p190, %p191
      %p193 = pneg %p192
      // Predicated region
      $region29: #{tpu_custom_call.1} parent=5 // pred_check
        _
      $region30: #{tpu_custom_call.1} parent=5 // pred_check_branch
        %195 = sbr.rel (%p192) target = $region32
      $region31: #{tpu_custom_call.1} parent=5 // pred_region
        %s196 = ssub.s32 %s16, 1
        %s197 = sand.u32 %s43, 1
        %s198 = scalar_lea.sflag [#allocation3], %s197
        %s199 = sand.u32 %s43, 1
        %s200 = smul.addr %s199, 8
        %s201 = scalar_lea.vmem [#allocation2], %s200
        // Predicated region
        $region33: #{tpu_custom_call.1} parent=31 // pred_check
          %p202 = pneg %p56
        $region34: #{tpu_custom_call.1} parent=31 // pred_check_branch
          %204 = sbr.rel (%p202) target = $region36
        $region35: #{tpu_custom_call.1} parent=31 // pred_region
          %205 = dma.done %s198, 128
        $region36: #{tpu_custom_call.1} parent=31 // pred_fallthru
          _
        // Predicated region
        $region37: #{tpu_custom_call.1} parent=31 // pred_check
          %p206 = pneg %p77
        $region38: #{tpu_custom_call.1} parent=31 // pred_check_branch
          %208 = sbr.rel (%p206) target = $region40
        $region39: #{tpu_custom_call.1} parent=31 // pred_region
          %209 = dma.done [#allocation6], 256
        $region40: #{tpu_custom_call.1} parent=31 // pred_fallthru
          _
        // Predicated region
        $region41: #{tpu_custom_call.1} parent=31 // pred_check
          %p210 = pneg %p98
        $region42: #{tpu_custom_call.1} parent=31 // pred_check_branch
          %212 = sbr.rel (%p210) target = $region44
        $region43: #{tpu_custom_call.1} parent=31 // pred_region
          %213 = dma.done [#allocation6], 64
        $region44: #{tpu_custom_call.1} parent=31 // pred_fallthru
          _
        %s214 = sand.u32 %s43, 1
        %s215 = scalar_lea.sflag [#allocation3], %s214
        %s216 = sand.u32 %s43, 1
        %s217 = smul.addr %s216, 8
        %s218 = scalar_lea.vmem [#allocation2], %s217
        %p219 = pneg %p56
        %p220 = pneg %p53
        %p221 = pneg %p77
        %p222 = pneg %p74
        %p223 = pneg %p98
        %p224 = pneg %p95
        %p225 = pneg %p126
        %p226 = pneg %p123
        %s227 = sand.u32 %s113, 1
        %s228 = scalar_lea.sflag [#allocation4], %s227
        %s229 = sand.u32 %s113, 1
        %s230 = smul.addr %s229, 8
        %s231 = scalar_lea.vmem [#allocation8], %s230
        %s232 = smul.u32 2, %s26
        %s233 = smul.u32 2, %s26
        %v234 = vld [vmem:[%s201] sm:$0xff]
        %v235 = vld [vmem:[#allocation7] sm:$0xf]
        %237 = vset.pattern.permute.xlu0 0
        %238 = vperm.xlu0 %237, %v235
        %v239 = vpop.permute.xlu0 %238
        %v241 = vunpack.c.l.s4 839922192
        %v242 = vunpack.c.0.s8 %v241
        %v243 = vlaneseq
        %v244 = vshrl.u32 %v243, 7
        %v245 = vsub.s32 %v242, %v244
        %v246 = vrot.slane %v239, %v245
        %v248 = vadd.f32 %v234, %v246
        %v249 = vld [vmem:[#allocation5] sm:$0xff]
        %v250 = vld [vmem:[#allocation5 + $0x8] sm:$0xff]
        %252 = vset.pattern.permute.xlu0 0
        %253 = vperm.xlu0 %252, %v249
        %v254 = vpop.permute.xlu0 %253
        %v257 = vlaneseq
        %v258 = vshrl.u32 %v257, 7
        %v259 = vsub.s32 0, %v258
        %v260 = vrot.slane %v234, %v259
        %v261 = vlaneseq
        %v262 = vshrl.u32 %v261, 7
        %v263 = vsub.s32 4, %v262
        %v264 = vrot.slane %v234, %v263
        %v267 = vlaneseq
        %v268 = vshrl.u32 %v267, 7
        %v269 = vsub.s32 0, %v268
        %v270 = vrot.slane %v260, %v269
        %v271 = vlaneseq
        %v272 = vshrl.u32 %v271, 7
        %v273 = vsub.s32 0, %v272
        %v274 = vrot.slane %v264, %v273
        %v275 = vmul.f32 %v254, %v270
        %v276 = vmul.f32 %v254, %v274
        %v279 = vcombine.low %v275, %v276
        %v281 = vadd.f32 %v248, %v279
        %v282 = vlaneseq
        %v283 = vshrl.u32 %v282, 7
        %v284 = vsub.s32 1, %v283
        %v285 = vrot.slane %v234, %v284
        %v286 = vlaneseq
        %v287 = vshrl.u32 %v286, 7
        %v288 = vsub.s32 5, %v287
        %v289 = vrot.slane %v234, %v288
        %v292 = vlaneseq
        %v293 = vshrl.u32 %v292, 7
        %v294 = vsub.s32 1, %v293
        %v295 = vrot.slane %v285, %v294
        %v296 = vlaneseq
        %v297 = vshrl.u32 %v296, 7
        %v298 = vsub.s32 1, %v297
        %v299 = vrot.slane %v289, %v298
        %v300 = vmul.f32 %v254, %v295
        %v301 = vmul.f32 %v254, %v299
        %v304 = vcombine.high %v300, %v301
        %v306 = vadd.f32 %v281, %v304
        %308 = vset.pattern.permute.xlu0 0
        %309 = vperm.xlu0 %308, %v250
        %v310 = vpop.permute.xlu0 %309
        %v312 = vlaneseq
        %v313 = vshrl.u32 %v312, 7
        %v314 = vsub.s32 2, %v313
        %v315 = vrot.slane %v234, %v314
        %v316 = vlaneseq
        %v317 = vshrl.u32 %v316, 7
        %v318 = vsub.s32 6, %v317
        %v319 = vrot.slane %v234, %v318
        %v322 = vlaneseq
        %v323 = vshrl.u32 %v322, 7
        %v324 = vsub.s32 2, %v323
        %v325 = vrot.slane %v315, %v324
        %v326 = vlaneseq
        %v327 = vshrl.u32 %v326, 7
        %v328 = vsub.s32 2, %v327
        %v329 = vrot.slane %v319, %v328
        %v330 = vmul.f32 %v310, %v325
        %v331 = vmul.f32 %v310, %v329
        %v334 = vcombine.low %v330, %v331
        %v336 = vadd.f32 %v306, %v334
        %v337 = vlaneseq
        %v338 = vshrl.u32 %v337, 7
        %v339 = vsub.s32 3, %v338
        %v340 = vrot.slane %v234, %v339
        %v341 = vlaneseq
        %v342 = vshrl.u32 %v341, 7
        %v343 = vsub.s32 7, %v342
        %v344 = vrot.slane %v234, %v343
        %v347 = vlaneseq
        %v348 = vshrl.u32 %v347, 7
        %v349 = vsub.s32 3, %v348
        %v350 = vrot.slane %v340, %v349
        %v351 = vlaneseq
        %v352 = vshrl.u32 %v351, 7
        %v353 = vsub.s32 3, %v352
        %v354 = vrot.slane %v344, %v353
        %v355 = vmul.f32 %v310, %v350
        %v356 = vmul.f32 %v310, %v354
        %v359 = vcombine.high %v355, %v356
        %v361 = vadd.f32 %v336, %v359
        %362 = vst [vmem:[%s231] sm:$0xff] %v361
        %s363 = sand.u32 %s113, 1
        %s364 = scalar_lea.sflag [#allocation4], %s363
        %s365 = sand.u32 %s113, 1
        %s366 = smul.addr %s365, 8
        %s367 = scalar_lea.vmem [#allocation8], %s366
        // Predicated region
        $region45: #{tpu_custom_call.1} parent=31 // pred_check
          %p368 = pneg %p123
        $region46: #{tpu_custom_call.1} parent=31 // pred_check_branch
          %370 = sbr.rel (%p368) target = $region48
        $region47: #{tpu_custom_call.1} parent=31 // pred_region
          %s371 = smul.u32 2, %s26
          %s373 = ssub.s32 128, 128
          %374 = vsyncadd %s364, %s373
          %s375 = smul.addr %s25, 2
          %s376 = sadd.s32 %s371, %s375
          %s377 = smul.addr %s376, 64
          %s378 = scalar_lea.hbm %s3, %s377
          %s380 = sshll.u32 %s367, 4
          %s381 = int_to_ptr.vmem [resolvable:$true] %s380
          %383 = dma.vmem_to_hbm [thread:$0]  %s381, 128, %s378, %s364
        $region48: #{tpu_custom_call.1} parent=31 // pred_fallthru
          _
      $region32: #{tpu_custom_call.1} parent=5 // pred_fallthru
        _
      %p384 = scmp.le.s32.totalorder 2, %s16
      // Predicated region
      $region49: #{tpu_custom_call.1} parent=5 // pred_check
        %p385 = pneg %p384
      $region50: #{tpu_custom_call.1} parent=5 // pred_check_branch
        %387 = sbr.rel (%p385) target = $region52
      $region51: #{tpu_custom_call.1} parent=5 // pred_region
        %s388 = ssub.s32 %s16, 2
        // Predicated region
        $region53: #{tpu_custom_call.1} parent=51 // pred_check
          %p389 = pneg %p129
        $region54: #{tpu_custom_call.1} parent=51 // pred_check_branch
          %391 = sbr.rel (%p389) target = $region56
        $region55: #{tpu_custom_call.1} parent=51 // pred_region
          %s392 = sand.u32 %s114, 1
          %s393 = scalar_lea.sflag [#allocation4], %s392
          %s394 = sand.u32 %s114, 1
          %s395 = smul.addr %s394, 8
          %s396 = scalar_lea.vmem [#allocation8], %s395
          %397 = dma.done %s393, 128
        $region56: #{tpu_custom_call.1} parent=51 // pred_fallthru
          _
      $region52: #{tpu_custom_call.1} parent=5 // pred_fallthru
        _
    $region6: #{tpu_custom_call.1} parent=1 // loop_footer
      %s20 = sadd.s32 1, %s16
    $region7: #{tpu_custom_call.1} parent=1 // loop_footer_branch
      %15 = sbr.rel target = $region3
    $region8: #{tpu_custom_call.1} parent=1 // loop_exit
      _
    %398 = vsyncpa [#allocation3], 1
    %s399 = scalar_lea.sflag [#allocation3], 1
    %400 = vsyncpa %s399, 1
    %401 = vsyncpa [#allocation6], 1
    %402 = vsyncpa [#allocation4], 1
    %s403 = scalar_lea.sflag [#allocation4], 1
    %404 = vsyncpa %s403, 1

</llo_original>
